<compile_context>
chip_gen: v7x
topology: tpu7x:2x2x1
jax: 0.10.0
libtpu: 0.0.40
codegen_flags: <defaults>
</compile_context>

<pallas_src>
import jax
import jax.numpy as jnp
from jax.experimental import pallas as pl
from jax.experimental.pallas import tpu as pltpu

HIDDEN = 256
SUBLANE = 8
SMALL_BATCH_MAX = 512   # <= this: single grid-less invocation, all-in-VMEM
MAX_TILE_B = 1024       # batch rows per grid step ceiling on the tiled path


def net_kernel(x_ref, w1_ref, b1_ref, w2_ref, b2_ref, o_ref):
    """One batch tile: o = relu(x @ W1 + b1) @ W2 + b2.

    Weights are bf16 (MXU-native); both matmuls accumulate in f32 and the
    bias-add / ReLU stay f32 (safe on every TPU generation).
    """
    x = x_ref[...].astype(w1_ref.dtype)                        # bf16 for the MXU
    h = jnp.dot(x, w1_ref[...], preferred_element_type=jnp.float32)
    h = jnp.maximum(h + b1_ref[...], 0.0)                      # f32 bias + ReLU (VPU)
    y = jnp.dot(h.astype(w2_ref.dtype), w2_ref[...],
                preferred_element_type=jnp.float32)
    o_ref[...] = (y + b2_ref[...]).astype(o_ref.dtype)


def _round_up(n, m):
    return ((n + m - 1) // m) * m


def _cost_estimate(batch, n_states, hidden, n_out):
    flops = 2 * batch * (n_states * hidden + hidden * n_out)
    bytes_accessed = (
        batch * n_states * 4                          # x (f32)
        + (n_states * hidden + hidden * n_out) * 2    # bf16 weights
        + (hidden + n_out) * 4                        # f32 biases
        + batch * n_out * 4)                          # f32 output
    return pl.CostEstimate(flops=flops, transcendentals=0,
                           bytes_accessed=bytes_accessed)


def net_forward(x, w1_t, b1, w2_t, b2):
    """Forward pass of `Net`.

    x    : [B, n_states]       f32
    w1_t : [n_states, 256]     bf16  (fc1.weight transposed)
    b1   : [1, 256]            f32
    w2_t : [256, n_states]     bf16  (out.weight transposed)
    b2   : [1, n_states]       f32
    returns [B, n_states] f32
    """
    B, n_states = x.shape
    hidden = w1_t.shape[1]
    n_out = w2_t.shape[1]
    if b1.ndim == 1:
        b1 = b1.reshape(1, hidden)
    if b2.ndim == 1:
        b2 = b2.reshape(1, n_out)

    if B <= SMALL_BATCH_MAX:
        # Grid-less path: whole arrays are the blocks (full-array dims, so no
        # (8,128) divisibility requirement); no wrapper pads or slices at all.
        vmem = pl.BlockSpec(memory_space=pltpu.MemorySpace.VMEM)
        return pl.pallas_call(
            net_kernel,
            out_shape=jax.ShapeDtypeStruct((B, n_out), jnp.float32),
            in_specs=[vmem, vmem, vmem, vmem, vmem],
            out_specs=vmem,
            cost_estimate=_cost_estimate(B, n_states, hidden, n_out),
        )(x, w1_t, b1, w2_t, b2)

    # Large batch: tile the batch dim.  Use big tiles (up to 1024 rows) to
    # amortize per-step pipeline overhead, but keep >= 2 grid steps so v7x's
    # two TensorCores both get work from the "parallel" axis.
    tile_b = min(MAX_TILE_B, _round_up(pl.cdiv(B, 2), SUBLANE))
    b_pad = _round_up(B, tile_b)
    if b_pad != B:
        x = jnp.pad(x, ((0, b_pad - B), (0, 0)))
    grid = (b_pad // tile_b,)
    out = pl.pallas_call(
        net_kernel,
        out_shape=jax.ShapeDtypeStruct((b_pad, n_out), jnp.float32),
        grid=grid,
        in_specs=[
            pl.BlockSpec((tile_b, n_states), lambda i: (i, 0)),
            pl.BlockSpec((n_states, hidden), lambda i: (0, 0)),   # VMEM-resident
            pl.BlockSpec((1, hidden), lambda i: (0, 0)),
            pl.BlockSpec((hidden, n_out), lambda i: (0, 0)),
            pl.BlockSpec((1, n_out), lambda i: (0, 0)),
        ],
        out_specs=pl.BlockSpec((tile_b, n_out), lambda i: (i, 0)),
        compiler_params=pltpu.CompilerParams(
            dimension_semantics=("parallel",)),
        cost_estimate=_cost_estimate(b_pad, n_states, hidden, n_out),
    )(x, w1_t, b1, w2_t, b2)
    # Padded batch rows produce relu(b1)@W2 + b2, so they must be dropped.
    return out if b_pad == B else out[:B]


def init_params(key, n_states, hidden=HIDDEN, weight_dtype=jnp.bfloat16):
    """Matches the PyTorch module's init: fc1.weight / out.weight ~ N(0, 0.1);
    biases follow nn.Linear's default U(-1/sqrt(fan_in), 1/sqrt(fan_in)).
    Weights are returned pre-transposed ([in, out]) in bf16 (MXU-native);
    biases are returned f32 and already shaped [1, features] so the wrapper
    needs no reshapes at call time."""
    k1, k2, k3, k4 = jax.random.split(key, 4)
    w1 = 0.1 * jax.random.normal(k1, (hidden, n_states), jnp.float32)   # fc1.weight
    b1 = jax.random.uniform(k2, (hidden,), jnp.float32,
                            -1.0 / jnp.sqrt(n_states), 1.0 / jnp.sqrt(n_states))
    w2 = 0.1 * jax.random.normal(k3, (n_states, hidden), jnp.float32)   # out.weight
    b2 = jax.random.uniform(k4, (n_states,), jnp.float32,
                            -1.0 / jnp.sqrt(hidden), 1.0 / jnp.sqrt(hidden))
    return (w1.T.astype(weight_dtype), b1.reshape(1, hidden),
            w2.T.astype(weight_dtype), b2.reshape(1, n_states))


def reference_forward(x, w1_t, b1, w2_t, b2):
    """Plain-JAX reference mirroring the kernel's dtypes (bf16 matmul, f32 acc).
    (Note: bf16 weights diverge from an f32 PyTorch module by up to ~1e-2 rel.)"""
    xb = x.astype(w1_t.dtype)
    h = jnp.dot(xb, w1_t, preferred_element_type=jnp.float32) + b1.reshape(1, -1)
    h = jnp.maximum(h, 0.0)
    y = jnp.dot(h.astype(w2_t.dtype), w2_t, preferred_element_type=jnp.float32)
    return y + b2.reshape(1, -1)


if __name__ == "__main__":
    key = jax.random.PRNGKey(0)
    n_states = 16    # e.g. 4x4 FrozenLake one-hot state
    n_actions = 4    # stored by the module but unused by forward()

    kp, kx1, kx2 = jax.random.split(key, 3)
    w1_t, b1, w2_t, b2 = init_params(kp, n_states)

    # Small batch -> grid-less single-invocation path (no pads / slices).
    x_small = jax.random.normal(kx1, (8, n_states), jnp.float32)
    out_small = jax.block_until_ready(net_forward(x_small, w1_t, b1, w2_t, b2))
    ref_small = reference_forward(x_small, w1_t, b1, w2_t, b2)
    assert out_small.shape == (8, n_states)
    assert jnp.allclose(out_small, ref_small, atol=2e-3, rtol=2e-3)

    # Larger batch -> batch-tiled path: tile_b = 656, grid = (2,) ("parallel"),
    # exercises the row-pad + row-slice corner as well.
    x_big = jax.random.normal(kx2, (1300, n_states), jnp.float32)
    out_big = jax.block_until_ready(net_forward(x_big, w1_t, b1, w2_t, b2))
    ref_big = reference_forward(x_big, w1_t, b1, w2_t, b2)
    assert out_big.shape == (1300, n_states)
    assert jnp.allclose(out_big, ref_big, atol=2e-3, rtol=2e-3)

    print("KERNEL_OK")
</pallas_src>

<mosaic_0001>
module attributes {stable_mosaic.version = 11 : i64} {
  func.func @net_kernel(%arg0: memref<8x16xf32, #tpu.memory_space<vmem>>, %arg1: memref<16x256xbf16, #tpu.memory_space<vmem>>, %arg2: memref<1x256xf32, #tpu.memory_space<vmem>>, %arg3: memref<256x16xbf16, #tpu.memory_space<vmem>>, %arg4: memref<1x16xf32, #tpu.memory_space<vmem>>, %arg5: memref<8x16xf32, #tpu.memory_space<vmem>>) attributes {dimension_semantics = [], scalar_prefetch = 0 : i64, scratch_operands = 0 : i64, tpu.core_type = #tpu.core_type<tc>} {
    %c0 = arith.constant 0 : index
    %c0_0 = arith.constant 0 : index
    %0 = vector.load %arg0[%c0, %c0_0] : memref<8x16xf32, #tpu.memory_space<vmem>>, vector<8x16xf32>
    %1 = arith.truncf %0 : vector<8x16xf32> to vector<8x16xbf16>
    %c0_1 = arith.constant 0 : index
    %c0_2 = arith.constant 0 : index
    %2 = vector.load %arg1[%c0_1, %c0_2] : memref<16x256xbf16, #tpu.memory_space<vmem>>, vector<16x256xbf16>
    %cst = arith.constant dense<0.000000e+00> : vector<8x256xf32>
    %3 = tpu.matmul %1, %2, %cst {dimension_numbers = #tpu.dot_dimension_numbers<[1], [0], [0], [1], [0, 0, 1, 1], [], []>} : vector<8x16xbf16>, vector<16x256xbf16>, vector<8x256xf32> -> vector<8x256xf32>
    %c0_3 = arith.constant 0 : index
    %c0_4 = arith.constant 0 : index
    %4 = vector.load %arg2[%c0_3, %c0_4] : memref<1x256xf32, #tpu.memory_space<vmem>>, vector<1x256xf32>
    %5 = vector.broadcast %4 : vector<1x256xf32> to vector<8x256xf32>
    %6 = arith.addf %3, %5 : vector<8x256xf32>
    %cst_5 = arith.constant 0.000000e+00 : f32
    %7 = vector.broadcast %cst_5 : f32 to vector<8x256xf32>
    %8 = arith.maximumf %6, %7 : vector<8x256xf32>
    %9 = arith.truncf %8 : vector<8x256xf32> to vector<8x256xbf16>
    %c0_6 = arith.constant 0 : index
    %c0_7 = arith.constant 0 : index
    %10 = vector.load %arg3[%c0_6, %c0_7] : memref<256x16xbf16, #tpu.memory_space<vmem>>, vector<256x16xbf16>
    %cst_8 = arith.constant dense<0.000000e+00> : vector<8x16xf32>
    %11 = tpu.matmul %9, %10, %cst_8 {dimension_numbers = #tpu.dot_dimension_numbers<[1], [0], [0], [1], [0, 0, 1, 1], [], []>} : vector<8x256xbf16>, vector<256x16xbf16>, vector<8x16xf32> -> vector<8x16xf32>
    %c0_9 = arith.constant 0 : index
    %c0_10 = arith.constant 0 : index
    %12 = vector.load %arg4[%c0_9, %c0_10] : memref<1x16xf32, #tpu.memory_space<vmem>>, vector<1x16xf32>
    %13 = vector.broadcast %12 : vector<1x16xf32> to vector<8x16xf32>
    %14 = arith.addf %11, %13 : vector<8x16xf32>
    %c0_11 = arith.constant 0 : index
    %c0_12 = arith.constant 0 : index
    %15 = vector.load %arg5[%c0_11, %c0_12] : memref<8x16xf32, #tpu.memory_space<vmem>>, vector<8x16xf32>
    tpu.vector_store %arg5[%c0_11, %c0_12], %14 {strides = array<i32>} : memref<8x16xf32, #tpu.memory_space<vmem>>, vector<8x16xf32>,
    return
  }
}

</mosaic_0001>

<llo_original>
// kernel: tpu_custom_call.1
$region0: #{tpu_custom_call.1}
  #allocation0 [shape = 'u32[]', space=smem, size = 0x4, offset = 0x4, fixed_abs, tag = 'smem constant byte address 0x4 - core index']
  #allocation1 [shape = 'u32[144,128]{1,0:T(1,128)}', space=vmem, size = 0x12000, scoped, tag = 'internal scratch']
  %s0 = inlined_call_operand.vmem [shape: f32[8,16], index: 0, kind: input, shape index: {}]
  %s1 = inlined_call_operand.vmem [shape: bf16[16,256], index: 1, kind: input, shape index: {}]
  %s2 = inlined_call_operand.vmem [shape: f32[1,256], index: 2, kind: input, shape index: {}]
  %s3 = inlined_call_operand.vmem [shape: bf16[256,16], index: 3, kind: input, shape index: {}]
  %s4 = inlined_call_operand.vmem [shape: f32[1,16], index: 4, kind: input, shape index: {}]
  %s5 = inlined_call_operand.hbm [shape: f32[8,16], index: 5, kind: output, shape index: {}]
  %s6 = sld [smem:[#allocation0]]
  $region30: #{tpu_custom_call.1} parent=0
    _
  %s8 = ssub.s32 1, %s6
  %s9 = scalar_select 0, %s8, %s6
  $region1: #{tpu_custom_call.1} parent=0
    #allocation2 [shape = 'u8[4096]{0}', space=vmem, size = 0x1000, scoped, tag = 'output window, operand 0, single buffered']
    #allocation3 [shape = 's32[1]{0}', space=sflag, size = 0x4, scoped, tag = 'scoped memory for tpu_custom_call.1']
    %10 = vsyncpa [#allocation3], 0
    // Predicated region
    $region2: #{tpu_custom_call.1} parent=1 // pred_check
      _
    $region3: #{tpu_custom_call.1} parent=1 // pred_check_branch
      %12 = sbr.rel (0) target = $region5
    $region4: #{tpu_custom_call.1} parent=1 // pred_region
      _
    $region5: #{tpu_custom_call.1} parent=1 // pred_fallthru
      _
    // Predicated region
    $region6: #{tpu_custom_call.1} parent=1 // pred_check
      _
    $region7: #{tpu_custom_call.1} parent=1 // pred_check_branch
      %14 = sbr.rel (0) target = $region9
    $region8: #{tpu_custom_call.1} parent=1 // pred_region
      _
    $region9: #{tpu_custom_call.1} parent=1 // pred_fallthru
      _
    // Predicated region
    $region10: #{tpu_custom_call.1} parent=1 // pred_check
      _
    $region11: #{tpu_custom_call.1} parent=1 // pred_check_branch
      %16 = sbr.rel (0) target = $region13
    $region12: #{tpu_custom_call.1} parent=1 // pred_region
      _
    $region13: #{tpu_custom_call.1} parent=1 // pred_fallthru
      _
    // Predicated region
    $region14: #{tpu_custom_call.1} parent=1 // pred_check
      _
    $region15: #{tpu_custom_call.1} parent=1 // pred_check_branch
      %18 = sbr.rel (0) target = $region17
    $region16: #{tpu_custom_call.1} parent=1 // pred_region
      _
    $region17: #{tpu_custom_call.1} parent=1 // pred_fallthru
      _
    // Predicated region
    $region18: #{tpu_custom_call.1} parent=1 // pred_check
      _
    $region19: #{tpu_custom_call.1} parent=1 // pred_check_branch
      %20 = sbr.rel (0) target = $region21
    $region20: #{tpu_custom_call.1} parent=1 // pred_region
      _
    $region21: #{tpu_custom_call.1} parent=1 // pred_fallthru
      _
    %v22 = vld [vmem:[%s0] sm:$0xff]
    %v23 = vpack.c.bf16 %v22, %v22
    %v24 = vld [vmem:[%s1] sm:$0xff]
    %v25 = vld [vmem:[%s1 + $0x8] sm:$0xff]
    %v26 = vld [vmem:[%s2] sm:$0x3]
    %v28 = vlaneseq
    %v29 = vshrl.u32 %v28, 7
    %v30 = vsub.s32 0, %v29
    %v31 = vrot.slane %v26, %v30
    %v32 = vlaneseq
    %v33 = vshrl.u32 %v32, 7
    %v34 = vsub.s32 1, %v33
    %v35 = vrot.slane %v26, %v34
    %v40 = vunpack.c.l.b16 %v24
    %v41 = vunpack.c.h.b16 %v24
    %v42 = vunpack.c.l.b16 %v25
    %v43 = vunpack.c.h.b16 %v25
    %v44 = vpack.c.b16 %v42, %v40
    %v45 = vpack.c.b16 %v43, %v41
    %vm48 = vcmask 130048
    %v50 = vsel %vm48, %v23, 0
    %52 = vmatprep.subr.bf16.mxu0 %v45
    %53 = vmatpush1.bf16.msra.mxu0 %v44
    %54 = vmatprep.subr.bf16.mxu0 0
    %55 = vmatpush1.bf16.msra.mxu0 0
    %56 = vmatprep.subr.bf16.mxu0 0
    %57 = vmatpush1.bf16.msra.mxu0 0
    %58 = vmatprep.subr.bf16.mxu0 0
    %59 = vmatpush1.bf16.msra.mxu0 0
    %60 = vmatprep.subr.bf16.mxu0 0
    %61 = vmatpush1.bf16.msra.mxu0 0
    %62 = vmatprep.subr.bf16.mxu0 0
    %63 = vmatpush1.bf16.msra.mxu0 0
    %64 = vmatprep.subr.bf16.mxu0 0
    %65 = vmatpush1.bf16.msra.mxu0 0
    %66 = vmatprep.subr.bf16.mxu0 0
    %67 = vmatpush1.bf16.msra.mxu0 0
    %68 = vmatprep.subr.bf16.mxu0 0
    %69 = vmatpush1.bf16.msra.mxu0 0
    %70 = vmatprep.subr.bf16.mxu0 0
    %71 = vmatpush1.bf16.msra.mxu0 0
    %72 = vmatprep.subr.bf16.mxu0 0
    %73 = vmatpush1.bf16.msra.mxu0 0
    %74 = vmatprep.subr.bf16.mxu0 0
    %75 = vmatpush1.bf16.msra.mxu0 0
    %76 = vmatprep.subr.bf16.mxu0 0
    %77 = vmatpush1.bf16.msra.mxu0 0
    %78 = vmatprep.subr.bf16.mxu0 0
    %79 = vmatpush1.bf16.msra.mxu0 0
    %80 = vmatprep.subr.bf16.mxu0 0
    %81 = vmatpush1.bf16.msra.mxu0 0
    %82 = vmatprep.subr.bf16.mxu0 0
    %83 = vmatpush1.bf16.msra.mxu0 0
    %84 = vmatprep.mubr.bf16.mxu0 0
    %85 = vmatmul.mubr.bf16.gmra.mrb[0].mxu0 %v50
    %v86 = vpop.f32.mrb[0].mxu0
    %v87 = vadd.f32 %v31, %v86
    %v88 = vpop.f32.mrb[0].mxu0
    %v89 = vadd.f32 %v35, %v88
    %v90 = vpop.f32.mrb[0].mxu0
    %v91 = vpop.f32.mrb[0].mxu0
    %92 = vdwg.mxu0
    %v93 = vmax.f32 %v87, 0.0
    %v94 = vmax.f32 %v89, 0.0
    %v95 = vpack.c.bf16 %v93, %v93
    %v96 = vpack.c.bf16 %v94, %v94
    %v97 = vld [vmem:[%s3] sm:$0xf]
    %v98 = vld [vmem:[%s3 + $0x4] sm:$0xf]
    %v99 = vld [vmem:[%s3 + $0x8] sm:$0xf]
    %v100 = vld [vmem:[%s3 + $0xc] sm:$0xf]
    %v101 = vld [vmem:[%s3 + $0x10] sm:$0xf]
    %v102 = vld [vmem:[%s3 + $0x14] sm:$0xf]
    %v103 = vld [vmem:[%s3 + $0x18] sm:$0xf]
    %v104 = vld [vmem:[%s3 + $0x1c] sm:$0xf]
    %v105 = vld [vmem:[%s3 + $0x20] sm:$0xf]
    %v106 = vld [vmem:[%s3 + $0x24] sm:$0xf]
    %v107 = vld [vmem:[%s3 + $0x28] sm:$0xf]
    %v108 = vld [vmem:[%s3 + $0x2c] sm:$0xf]
    %v109 = vld [vmem:[%s3 + $0x30] sm:$0xf]
    %v110 = vld [vmem:[%s3 + $0x34] sm:$0xf]
    %v111 = vld [vmem:[%s3 + $0x38] sm:$0xf]
    %v112 = vld [vmem:[%s3 + $0x3c] sm:$0xf]
    %v113 = vld [vmem:[%s3 + $0x40] sm:$0xf]
    %v114 = vld [vmem:[%s3 + $0x44] sm:$0xf]
    %v115 = vld [vmem:[%s3 + $0x48] sm:$0xf]
    %v116 = vld [vmem:[%s3 + $0x4c] sm:$0xf]
    %v117 = vld [vmem:[%s3 + $0x50] sm:$0xf]
    %v118 = vld [vmem:[%s3 + $0x54] sm:$0xf]
    %v119 = vld [vmem:[%s3 + $0x58] sm:$0xf]
    %v120 = vld [vmem:[%s3 + $0x5c] sm:$0xf]
    %v121 = vld [vmem:[%s3 + $0x60] sm:$0xf]
    %v122 = vld [vmem:[%s3 + $0x64] sm:$0xf]
    %v123 = vld [vmem:[%s3 + $0x68] sm:$0xf]
    %v124 = vld [vmem:[%s3 + $0x6c] sm:$0xf]
    %v125 = vld [vmem:[%s3 + $0x70] sm:$0xf]
    %v126 = vld [vmem:[%s3 + $0x74] sm:$0xf]
    %v127 = vld [vmem:[%s3 + $0x78] sm:$0xf]
    %v128 = vld [vmem:[%s3 + $0x7c] sm:$0xf]
    %v129 = vld [vmem:[%s4] sm:$0x1]
    %v131 = vlaneseq
    %v132 = vshrl.u32 %v131, 7
    %v133 = vsub.s32 0, %v132
    %v134 = vrot.slane %v129, %v133
    %v168 = vunpack.c.l.b16 %v97
    %v169 = vunpack.c.l.b16 %v98
    %v170 = vunpack.c.l.b16 %v99
    %v171 = vunpack.c.l.b16 %v100
    %v172 = vunpack.c.l.b16 %v101
    %v173 = vunpack.c.l.b16 %v102
    %v174 = vunpack.c.l.b16 %v103
    %v175 = vunpack.c.l.b16 %v104
    %v176 = vunpack.c.l.b16 %v105
    %v177 = vunpack.c.l.b16 %v106
    %v178 = vunpack.c.l.b16 %v107
    %v179 = vunpack.c.l.b16 %v108
    %v180 = vunpack.c.l.b16 %v109
    %v181 = vunpack.c.l.b16 %v110
    %v182 = vunpack.c.l.b16 %v111
    %v183 = vunpack.c.l.b16 %v112
    %v184 = vunpack.c.l.b16 %v113
    %v185 = vunpack.c.l.b16 %v114
    %v186 = vunpack.c.l.b16 %v115
    %v187 = vunpack.c.l.b16 %v116
    %v188 = vunpack.c.l.b16 %v117
    %v189 = vunpack.c.l.b16 %v118
    %v190 = vunpack.c.l.b16 %v119
    %v191 = vunpack.c.l.b16 %v120
    %v192 = vunpack.c.l.b16 %v121
    %v193 = vunpack.c.l.b16 %v122
    %v194 = vunpack.c.l.b16 %v123
    %v195 = vunpack.c.l.b16 %v124
    %v196 = vunpack.c.l.b16 %v125
    %v197 = vunpack.c.l.b16 %v126
    %v198 = vunpack.c.l.b16 %v127
    %v199 = vunpack.c.l.b16 %v128
    %v200 = vpack.c.b16 %v169, %v168
    %v201 = vpack.c.b16 %v171, %v170
    %v202 = vpack.c.b16 %v173, %v172
    %v203 = vpack.c.b16 %v175, %v174
    %v204 = vpack.c.b16 %v177, %v176
    %v205 = vpack.c.b16 %v179, %v178
    %v206 = vpack.c.b16 %v181, %v180
    %v207 = vpack.c.b16 %v183, %v182
    %v208 = vpack.c.b16 %v185, %v184
    %v209 = vpack.c.b16 %v187, %v186
    %v210 = vpack.c.b16 %v189, %v188
    %v211 = vpack.c.b16 %v191, %v190
    %v212 = vpack.c.b16 %v193, %v192
    %v213 = vpack.c.b16 %v195, %v194
    %v214 = vpack.c.b16 %v197, %v196
    %v215 = vpack.c.b16 %v199, %v198
    %232 = vmatprep.subr.bf16.mxu0 0
    %233 = vmatpush1.bf16.msra.mxu0 %v200
    %234 = vmatprep.subr.bf16.mxu0 0
    %235 = vmatpush1.bf16.msra.mxu0 %v201
    %236 = vmatprep.subr.bf16.mxu0 0
    %237 = vmatpush1.bf16.msra.mxu0 %v202
    %238 = vmatprep.subr.bf16.mxu0 0
    %239 = vmatpush1.bf16.msra.mxu0 %v203
    %240 = vmatprep.subr.bf16.mxu0 0
    %241 = vmatpush1.bf16.msra.mxu0 %v204
    %242 = vmatprep.subr.bf16.mxu0 0
    %243 = vmatpush1.bf16.msra.mxu0 %v205
    %244 = vmatprep.subr.bf16.mxu0 0
    %245 = vmatpush1.bf16.msra.mxu0 %v206
    %246 = vmatprep.subr.bf16.mxu0 0
    %247 = vmatpush1.bf16.msra.mxu0 %v207
    %248 = vmatprep.subr.bf16.mxu0 0
    %249 = vmatpush1.bf16.msra.mxu0 %v208
    %250 = vmatprep.subr.bf16.mxu0 0
    %251 = vmatpush1.bf16.msra.mxu0 %v209
    %252 = vmatprep.subr.bf16.mxu0 0
    %253 = vmatpush1.bf16.msra.mxu0 %v210
    %254 = vmatprep.subr.bf16.mxu0 0
    %255 = vmatpush1.bf16.msra.mxu0 %v211
    %256 = vmatprep.subr.bf16.mxu0 0
    %257 = vmatpush1.bf16.msra.mxu0 %v212
    %258 = vmatprep.subr.bf16.mxu0 0
    %259 = vmatpush1.bf16.msra.mxu0 %v213
    %260 = vmatprep.subr.bf16.mxu0 0
    %261 = vmatpush1.bf16.msra.mxu0 %v214
    %262 = vmatprep.subr.bf16.mxu0 0
    %263 = vmatpush1.bf16.msra.mxu0 %v215
    %264 = vmatprep.mubr.bf16.mxu0 %v96
    %265 = vmatmul.mubr.bf16.gmra.mrb[0].mxu0 %v95
    %v266 = vpop.f32.mrb[0].mxu0
    %v267 = vadd.f32 %v134, %v266
    %v268 = vpop.f32.mrb[0].mxu0
    %v269 = vpop.f32.mrb[0].mxu0
    %v270 = vpop.f32.mrb[0].mxu0
    %271 = vdwg.mxu0
    %272 = vst.msk [vmem:[#allocation2] sm:$0xff] %vm48, %v267
    // Predicated region
    $region22: #{tpu_custom_call.1} parent=1 // pred_check
      _
    $region23: #{tpu_custom_call.1} parent=1 // pred_check_branch
      %274 = sbr.rel (0) target = $region25
    $region24: #{tpu_custom_call.1} parent=1 // pred_region
      %s276 = ssub.s32 128, 128
      %277 = vsyncadd [#allocation3], %s276
      %s279 = sshll.u32 [#allocation2], 4
      %s280 = int_to_ptr.vmem [resolvable:$true] %s279
      %282 = dma.vmem_to_hbm [thread:$0]  %s280, 128, %s5, [#allocation3]
    $region25: #{tpu_custom_call.1} parent=1 // pred_fallthru
      _
    // Predicated region
    $region26: #{tpu_custom_call.1} parent=1 // pred_check
      _
    $region27: #{tpu_custom_call.1} parent=1 // pred_check_branch
      %284 = sbr.rel (0) target = $region29
    $region28: #{tpu_custom_call.1} parent=1 // pred_region
      %285 = dma.done [#allocation3], 128
    $region29: #{tpu_custom_call.1} parent=1 // pred_fallthru
      _
    %286 = vsyncpa [#allocation3], 1

</llo_original>
